<compile_context>
chip_gen: v6e
topology: v6e:2x2x1
jax: 0.10.0
libtpu: 0.0.40
codegen_flags: <defaults>
</compile_context>

<pallas_src>
from functools import partial

import jax
import jax.numpy as jnp
from jax.experimental import pallas as pl
from jax.experimental.pallas import tpu as pltpu


def channel_attention_kernel(x_ref, w1_ref, w2t_ref, o_ref):
    # x_ref:   (Nb, C, HWp)  input slab
    # w1_ref:  (Ch, C)       fc1 weight (out_ch, in_ch)
    # w2t_ref: (Ch, C)       fc2 weight, pre-transposed (in_ch, out_ch)
    # o_ref:   (Nb, C, HWp)  output slab

    # AdaptiveMaxPool2d(1): max over the (padded) spatial axis per channel.
    # Padding (if any) was filled with dtype-min so it never wins the max.
    pooled = jnp.max(x_ref[...], axis=-1).astype(jnp.float32)          # (Nb, C)

    # fc1 (1x1 conv, no bias) + ReLU on the VPU:
    #   h[n, j] = sum_c w1[j, c] * pooled[n, c]
    h = jnp.sum(pooled[:, None, :] * w1_ref[...][None, :, :], axis=-1)  # (Nb, Ch)
    h = jnp.maximum(h, 0.0)

    # fc2 (1x1 conv, no bias) + sigmoid:
    #   a[n, c] = sum_j w2[c, j] * h[n, j] = sum_j h[n, j] * w2t[j, c]
    a = jnp.sum(h[:, :, None] * w2t_ref[...][None, :, :], axis=1)       # (Nb, C)
    att = jax.nn.sigmoid(a)                                             # (Nb, C)

    # Broadcast-multiply over the spatial axis.  Re-index x_ref here (rather
    # than reusing the value loaded for the max) so the full slab is not kept
    # live as one SSA value across the reduction (avoids vreg spill pressure
    # once blocks get multi-MiB).
    o_ref[...] = (x_ref[...] * att[:, :, None]).astype(o_ref.dtype)


def _pick_batch_block(n, per_batch_bytes, target_bytes):
    """Largest divisor of n whose per-buffer block stays under target_bytes.

    For n > 1 we also keep at least two grid steps so the 'parallel' batch
    axis can be split across the two TensorCores on v7x (no-op on v5e/v6e).
    """
    cap = max(1, target_bytes // per_batch_bytes)
    if n > 1:
        cap = min(cap, max(1, n // 2))
    nb = 1
    for d in range(1, n + 1):
        if n % d == 0 and d <= cap:
            nb = d
    return nb


@partial(jax.jit, static_argnames=("target_block_bytes", "vmem_limit_bytes"))
def channel_attention(x, w1, w2, *, target_block_bytes=4 << 20,
                      vmem_limit_bytes=48 << 20):
    """x: (N, C, H, W); w1: (C//16, C); w2: (C, C//16). Returns (N, C, H, W)."""
    N, C, H, W = x.shape
    Ch = w1.shape[0]
    HW = H * W

    # Lane-dense spatial axis: pad H*W up to a multiple of 128 so every store
    # is a full (unmasked) vst.  Pad with dtype-min so the max-pool result is
    # unchanged; the padded columns are sliced off below.
    HWp = ((HW + 127) // 128) * 128
    x3 = x.reshape(N, C, HW)
    if HWp != HW:
        x3 = jnp.pad(x3, ((0, 0), (0, 0), (0, HWp - HW)),
                     constant_values=jnp.finfo(x.dtype).min)

    # fc2 weight pre-transposed so both weight operands are lane-dense along C.
    w1f = w1.astype(jnp.float32)
    w2t = jnp.transpose(w2).astype(jnp.float32)                         # (Ch, C)

    # Batch-block size: multi-MiB slabs amortize the ~0.35us per-step overhead
    # and keep the DMA pipeline near the HBM roofline.  The 4 MiB target keeps
    # 2x(in) + 2x(out) double-buffered blocks (+ tiny weights) well inside the
    # 48 MiB VMEM budget, which is safe on v7x (64 MiB) and raised above the
    # 32 MiB default scoped limit for v5e/v6e (128 MiB physical).
    per_batch_bytes = C * HWp * x.dtype.itemsize
    Nb = _pick_batch_block(N, per_batch_bytes, target_block_bytes)
    grid = (N // Nb,)

    out = pl.pallas_call(
        channel_attention_kernel,
        out_shape=jax.ShapeDtypeStruct((N, C, HWp), x.dtype),
        grid_spec=pltpu.PrefetchScalarGridSpec(
            num_scalar_prefetch=0,
            grid=grid,
            in_specs=[
                pl.BlockSpec((Nb, C, HWp), lambda n: (n, 0, 0)),
                pl.BlockSpec((Ch, C), lambda n: (0, 0)),
                pl.BlockSpec((Ch, C), lambda n: (0, 0)),
            ],
            out_specs=pl.BlockSpec((Nb, C, HWp), lambda n: (n, 0, 0)),
        ),
        compiler_params=pltpu.CompilerParams(
            dimension_semantics=("parallel",),
            vmem_limit_bytes=vmem_limit_bytes),
        # Every output element overwrites the corresponding input element, so
        # let the output reuse the x3 HBM buffer (halves HBM footprint).
        input_output_aliases={0: 0},
    )(x3, w1f, w2t)

    if HWp != HW:
        out = out[:, :, :HW]
    return out.reshape(N, C, H, W)


def channel_attention_ref(x, w1, w2):
    # Pure-JAX reference matching the PyTorch forward.
    hp = jax.lax.Precision.HIGHEST
    pooled = jnp.max(x, axis=(2, 3))                                    # (N, C)
    h = jnp.maximum(jnp.einsum('hc,nc->nh', w1, pooled, precision=hp), 0.0)
    a = jnp.einsum('ch,nh->nc', w2, h, precision=hp)
    att = jax.nn.sigmoid(a)[:, :, None, None]                           # (N, C, 1, 1)
    return x * att


if __name__ == "__main__":
    key = jax.random.PRNGKey(0)

    # Case 1: aligned spatial extent (HW = 256, a multiple of 128).
    N, C, H, W = 2, 32, 16, 16
    Ch = C // 16
    kx, k1, k2, key = jax.random.split(key, 4)
    x = jax.random.normal(kx, (N, C, H, W), dtype=jnp.float32)
    # Conv2d 1x1 weights (out_ch, in_ch, 1, 1) squeezed to 2-D matmul form.
    w1 = jax.random.normal(k1, (Ch, C), dtype=jnp.float32) * 0.1
    w2 = jax.random.normal(k2, (C, Ch), dtype=jnp.float32) * 0.1
    out = jax.block_until_ready(channel_attention(x, w1, w2))
    ref = channel_attention_ref(x, w1, w2)
    assert out.shape == (N, C, H, W)
    assert jnp.allclose(out, ref, atol=1e-5, rtol=1e-5), "case1 mismatch"

    # Case 2: unaligned spatial extent (HW = 81 -> padded to 128), odd batch.
    N2, C2, H2, W2 = 3, 48, 9, 9
    Ch2 = C2 // 16
    kx2, k12, k22, key = jax.random.split(key, 4)
    x2 = jax.random.normal(kx2, (N2, C2, H2, W2), dtype=jnp.float32)
    w1b = jax.random.normal(k12, (Ch2, C2), dtype=jnp.float32) * 0.1
    w2b = jax.random.normal(k22, (C2, Ch2), dtype=jnp.float32) * 0.1
    out2 = jax.block_until_ready(channel_attention(x2, w1b, w2b))
    ref2 = channel_attention_ref(x2, w1b, w2b)
    assert out2.shape == (N2, C2, H2, W2)
    assert jnp.allclose(out2, ref2, atol=1e-5, rtol=1e-5), "case2 mismatch"

    print("KERNEL_OK")
</pallas_src>

<mosaic_0001>
module attributes {stable_mosaic.version = 11 : i64} {
  func.func @channel_attention_kernel(%arg0: i32, %arg1: memref<1x32x256xf32, #tpu.memory_space<vmem>>, %arg2: memref<2x32xf32, #tpu.memory_space<vmem>>, %arg3: memref<2x32xf32, #tpu.memory_space<vmem>>, %arg4: memref<1x32x256xf32, #tpu.memory_space<vmem>>) attributes {dimension_semantics = [#tpu.dimension_semantics<parallel>], iteration_bounds = array<i64: 2>, scalar_prefetch = 0 : i64, scratch_operands = 0 : i64, tpu.core_type = #tpu.core_type<tc>, window_params = [{transform_indices = @transform_0, window_bounds = array<i64: 1, 32, 256>}, {pipeline_mode = #tpu.pipeline_mode<synchronous>, transform_indices = @transform_1, window_bounds = array<i64: 2, 32>}, {pipeline_mode = #tpu.pipeline_mode<synchronous>, transform_indices = @transform_2, window_bounds = array<i64: 2, 32>}, {transform_indices = @transform_3, window_bounds = array<i64: 1, 32, 256>}]} {
    %c0 = arith.constant 0 : index
    %c0_0 = arith.constant 0 : index
    %c0_1 = arith.constant 0 : index
    %0 = vector.load %arg1[%c0, %c0_0, %c0_1] : memref<1x32x256xf32, #tpu.memory_space<vmem>>, vector<1x32x256xf32>
    %cst = arith.constant dense<0xFF800000> : vector<1x32xf32>
    %1 = vector.multi_reduction <maximumf>, %0, %cst [2] : vector<1x32x256xf32> to vector<1x32xf32>
    %2 = vector.shape_cast %1 : vector<1x32xf32> to vector<1x1x32xf32>
    %c0_2 = arith.constant 0 : index
    %c0_3 = arith.constant 0 : index
    %3 = vector.load %arg2[%c0_2, %c0_3] : memref<2x32xf32, #tpu.memory_space<vmem>>, vector<2x32xf32>
    %4 = vector.shape_cast %3 : vector<2x32xf32> to vector<1x2x32xf32>
    %5 = vector.broadcast %2 : vector<1x1x32xf32> to vector<1x2x32xf32>
    %6 = arith.mulf %5, %4 : vector<1x2x32xf32>
    %cst_4 = arith.constant dense<0.000000e+00> : vector<1x2xf32>
    %7 = vector.multi_reduction <add>, %6, %cst_4 [2] : vector<1x2x32xf32> to vector<1x2xf32>
    %cst_5 = arith.constant 0.000000e+00 : f32
    %8 = vector.broadcast %cst_5 : f32 to vector<1x2xf32>
    %9 = arith.maximumf %7, %8 : vector<1x2xf32>
    %10 = vector.shape_cast %9 : vector<1x2xf32> to vector<1x2x1xf32>
    %c0_6 = arith.constant 0 : index
    %c0_7 = arith.constant 0 : index
    %11 = vector.load %arg3[%c0_6, %c0_7] : memref<2x32xf32, #tpu.memory_space<vmem>>, vector<2x32xf32>
    %12 = vector.shape_cast %11 : vector<2x32xf32> to vector<1x2x32xf32>
    %13 = vector.broadcast %10 : vector<1x2x1xf32> to vector<1x2x32xf32>
    %14 = arith.mulf %13, %12 : vector<1x2x32xf32>
    %cst_8 = arith.constant dense<0.000000e+00> : vector<1x32xf32>
    %15 = vector.multi_reduction <add>, %14, %cst_8 [1] : vector<1x2x32xf32> to vector<1x32xf32>
    %16 = arith.negf %15 : vector<1x32xf32>
    %17 = math.exp %16 : vector<1x32xf32>
    %cst_9 = arith.constant 1.000000e+00 : f32
    %18 = vector.broadcast %cst_9 : f32 to vector<1x32xf32>
    %19 = arith.addf %18, %17 : vector<1x32xf32>
    %20 = arith.divf %18, %19 : vector<1x32xf32>
    %c0_10 = arith.constant 0 : index
    %c0_11 = arith.constant 0 : index
    %c0_12 = arith.constant 0 : index
    %21 = vector.load %arg1[%c0_10, %c0_11, %c0_12] : memref<1x32x256xf32, #tpu.memory_space<vmem>>, vector<1x32x256xf32>
    %22 = vector.shape_cast %20 : vector<1x32xf32> to vector<1x32x1xf32>
    %23 = vector.broadcast %22 : vector<1x32x1xf32> to vector<1x32x256xf32>
    %24 = arith.mulf %21, %23 : vector<1x32x256xf32>
    %c0_13 = arith.constant 0 : index
    %c0_14 = arith.constant 0 : index
    %c0_15 = arith.constant 0 : index
    %25 = vector.load %arg4[%c0_13, %c0_14, %c0_15] : memref<1x32x256xf32, #tpu.memory_space<vmem>>, vector<1x32x256xf32>
    tpu.vector_store %arg4[%c0_13, %c0_14, %c0_15], %24 {strides = array<i32>} : memref<1x32x256xf32, #tpu.memory_space<vmem>>, vector<1x32x256xf32>,
    return
  }
  func.func @transform_0(%arg0: i32) -> (i32, i32, i32) {
    %c0_i32 = arith.constant 0 : i32
    %c0_i32_0 = arith.constant 0 : i32
    %c0_i32_1 = arith.constant 0 : i32
    return %arg0, %c0_i32, %c0_i32_0 : i32, i32, i32
  }
  func.func @transform_1(%arg0: i32) -> (i32, i32) {
    %c0_i32 = arith.constant 0 : i32
    %c0_i32_0 = arith.constant 0 : i32
    %c0_i32_1 = arith.constant 0 : i32
    return %c0_i32, %c0_i32_0 : i32, i32
  }
  func.func @transform_2(%arg0: i32) -> (i32, i32) {
    %c0_i32 = arith.constant 0 : i32
    %c0_i32_0 = arith.constant 0 : i32
    %c0_i32_1 = arith.constant 0 : i32
    return %c0_i32, %c0_i32_0 : i32, i32
  }
  func.func @transform_3(%arg0: i32) -> (i32, i32, i32) {
    %c0_i32 = arith.constant 0 : i32
    %c0_i32_0 = arith.constant 0 : i32
    %c0_i32_1 = arith.constant 0 : i32
    return %arg0, %c0_i32, %c0_i32_0 : i32, i32, i32
  }
}

</mosaic_0001>

<llo_original>
// kernel: channel_attention.1
$region0: #{channel_attention.1}
  #allocation0 [shape = 'u32[]', space=smem, size = 0x4, offset = 0x4, fixed_abs, tag = 'smem constant byte address 0x4 - core index']
  #allocation1 [shape = 'u32[144,128]{1,0:T(1,128)}', space=vmem, size = 0x12000, scoped, tag = 'internal scratch']
  %s0 = inlined_call_operand.vmem [shape: f32[2,32,256], index: 0, kind: input, shape index: {}, may-alias: {0,3}]
  %s1 = inlined_call_operand.vmem [shape: f32[2,32], index: 1, kind: input, shape index: {}]
  %s2 = inlined_call_operand.vmem [shape: f32[2,32], index: 2, kind: input, shape index: {}]
  %s3 = inlined_call_operand.vmem [shape: f32[2,32,256], index: 3, kind: output, shape index: {}, may-alias: {0,3}]
  %s4 = sld [smem:[#allocation0]]
  $region45: #{channel_attention.1} parent=0
    _
  %s6 = ssub.s32 1, %s4
  %s7 = scalar_select 0, %s6, %s4
  loop: start=0, step=1, limit=4
  $region2: #{channel_attention.1} parent=0 // loop_pre_header
    _
  $region3: #{channel_attention.1} parent=0 // loop_header
    %s9 = sphi 0, %s13
    %p10 = scmp.ge.s32.totalorder %s9, 4
    %s19 = sphi 0, %s21
    %s22 = sphi 0, %s19
    %s23 = sphi 0, %s22
    %s39 = sphi 0, %s23
    %s43 = sphi 0, %s43
    %s45 = sphi 0, %s43
    %s46 = sphi 0, %s45
    %s60 = sphi 0, %s46
    %s64 = sphi 0, %s64
    %s66 = sphi 0, %s64
    %s67 = sphi 0, %s66
    %s81 = sphi 0, %s67
    %s87 = sphi 0, %s89
    %s90 = sphi 0, %s87
    %s91 = sphi 0, %s90
    %s107 = sphi 0, %s91
  $region4: #{channel_attention.1} parent=0 // loop_header_branch
    %12 = sbr.rel (%p10) target = $region8
  $region5: #{channel_attention.1} parent=0 // loop_body
    %s14 = ssub.s32 %s9, 1
    %s15 = ssub.s32 %s9, 2
    %s16 = sadd.s32 %s9, 1
    %s17 = ssub.s32 %s9, %s16
    %p18 = scmp.eq.s32.totalorder %s17, 0
    %s20 = sadd.s32 %s19, 1
    %s21 = scalar_select %p18, %s19, %s20
    %p24 = pneg %p18
    %p25 = scmp.eq.s32.totalorder %s9, 1
    %p26 = por %p24, %p25
    %p27 = scmp.ne.s32.totalorder %s19, %s22
    %p28 = scmp.eq.s32.totalorder %s9, 0
    %p29 = por %p27, %p28
    %p30 = scmp.ne.s32.totalorder %s19, %s22
    %p31 = scmp.eq.s32.totalorder %s14, 1
    %p32 = por %p30, %p31
    %p33 = scmp.ne.s32.totalorder %s22, %s23
    %p34 = scmp.eq.s32.totalorder %s14, 0
    %p35 = por %p33, %p34
    %p36 = scmp.ne.s32.totalorder %s22, %s23
    %p37 = scmp.eq.s32.totalorder %s15, 1
    %p38 = por %p36, %p37
    %p40 = scmp.ne.s32.totalorder %s23, %s39
    %p41 = scmp.eq.s32.totalorder %s15, 0
    %p42 = por %p40, %p41
    %s44 = sadd.s32 %s43, 1
    %p47 = scmp.eq.s32.totalorder %s9, 1
    %p48 = scmp.ne.s32.totalorder %s43, %s45
    %p49 = scmp.eq.s32.totalorder %s9, 0
    %p50 = por %p48, %p49
    %p51 = scmp.ne.s32.totalorder %s43, %s45
    %p52 = scmp.eq.s32.totalorder %s14, 1
    %p53 = por %p51, %p52
    %p54 = scmp.ne.s32.totalorder %s45, %s46
    %p55 = scmp.eq.s32.totalorder %s14, 0
    %p56 = por %p54, %p55
    %p57 = scmp.ne.s32.totalorder %s45, %s46
    %p58 = scmp.eq.s32.totalorder %s15, 1
    %p59 = por %p57, %p58
    %p61 = scmp.ne.s32.totalorder %s46, %s60
    %p62 = scmp.eq.s32.totalorder %s15, 0
    %p63 = por %p61, %p62
    %s65 = sadd.s32 %s64, 1
    %p68 = scmp.eq.s32.totalorder %s9, 1
    %p69 = scmp.ne.s32.totalorder %s64, %s66
    %p70 = scmp.eq.s32.totalorder %s9, 0
    %p71 = por %p69, %p70
    %p72 = scmp.ne.s32.totalorder %s64, %s66
    %p73 = scmp.eq.s32.totalorder %s14, 1
    %p74 = por %p72, %p73
    %p75 = scmp.ne.s32.totalorder %s66, %s67
    %p76 = scmp.eq.s32.totalorder %s14, 0
    %p77 = por %p75, %p76
    %p78 = scmp.ne.s32.totalorder %s66, %s67
    %p79 = scmp.eq.s32.totalorder %s15, 1
    %p80 = por %p78, %p79
    %p82 = scmp.ne.s32.totalorder %s67, %s81
    %p83 = scmp.eq.s32.totalorder %s15, 0
    %p84 = por %p82, %p83
    %s85 = ssub.s32 %s9, %s16
    %p86 = scmp.eq.s32.totalorder %s85, 0
    %s88 = sadd.s32 %s87, 1
    %s89 = scalar_select %p86, %s87, %s88
    %p92 = pneg %p86
    %p93 = scmp.eq.s32.totalorder %s9, 1
    %p94 = por %p92, %p93
    %p95 = scmp.ne.s32.totalorder %s87, %s90
    %p96 = scmp.eq.s32.totalorder %s9, 0
    %p97 = por %p95, %p96
    %p98 = scmp.ne.s32.totalorder %s87, %s90
    %p99 = scmp.eq.s32.totalorder %s14, 1
    %p100 = por %p98, %p99
    %p101 = scmp.ne.s32.totalorder %s90, %s91
    %p102 = scmp.eq.s32.totalorder %s14, 0
    %p103 = por %p101, %p102
    %p104 = scmp.ne.s32.totalorder %s90, %s91
    %p105 = scmp.eq.s32.totalorder %s15, 1
    %p106 = por %p104, %p105
    %p108 = scmp.ne.s32.totalorder %s91, %s107
    %p109 = scmp.eq.s32.totalorder %s15, 0
    %p110 = por %p108, %p109
    %p111 = scmp.le.s32.totalorder 1, %s9
    %p112 = scmp.lt.s32.totalorder %s9, 3
    %p113 = pnand %p111, %p112
    %p114 = pneg %p113
    // Predicated region
    $region9: #{channel_attention.1} parent=5 // pred_check
      _
    $region10: #{channel_attention.1} parent=5 // pred_check_branch
      %116 = sbr.rel (%p113) target = $region12
    $region11: #{channel_attention.1} parent=5 // pred_region
      %s117 = ssub.s32 %s9, 1
      // Predicated region
      $region13: #{channel_attention.1} parent=11 // pred_check
        %p118 = pneg %p56
      $region14: #{channel_attention.1} parent=11 // pred_check_branch
        %120 = sbr.rel (%p118) target = $region16
      $region15: #{channel_attention.1} parent=11 // pred_region
        _
      $region16: #{channel_attention.1} parent=11 // pred_fallthru
        _
      // Predicated region
      $region17: #{channel_attention.1} parent=11 // pred_check
        %p121 = pneg %p77
      $region18: #{channel_attention.1} parent=11 // pred_check_branch
        %123 = sbr.rel (%p121) target = $region20
      $region19: #{channel_attention.1} parent=11 // pred_region
        _
      $region20: #{channel_attention.1} parent=11 // pred_fallthru
        _
    $region12: #{channel_attention.1} parent=5 // pred_fallthru
      _
    %p124 = scmp.lt.s32.totalorder %s9, 2
    // Predicated region
    $region21: #{channel_attention.1} parent=5 // pred_check
      %p125 = pneg %p124
    $region22: #{channel_attention.1} parent=5 // pred_check_branch
      %127 = sbr.rel (%p125) target = $region24
    $region23: #{channel_attention.1} parent=5 // pred_region
      // Predicated region
      $region25: #{channel_attention.1} parent=23 // pred_check
        %p128 = pneg %p29
      $region26: #{channel_attention.1} parent=23 // pred_check_branch
        %130 = sbr.rel (%p128) target = $region28
      $region27: #{channel_attention.1} parent=23 // pred_region
        %p131 = scmp.lt.s32.totalorder %s9, 1
        %s132 = scalar_select %p131, %s9, 1
        %s133 = smul.addr %s132, 8
        %s134 = smul.addr %s133, 8
        %s135 = scalar_lea.vmem %s0, %s134
      $region28: #{channel_attention.1} parent=23 // pred_fallthru
        _
    $region24: #{channel_attention.1} parent=5 // pred_fallthru
      _
    %p136 = scmp.le.s32.totalorder 1, %s9
    %p137 = scmp.lt.s32.totalorder %s9, 3
    %p138 = pnand %p136, %p137
    %p139 = pneg %p138
    // Predicated region
    $region29: #{channel_attention.1} parent=5 // pred_check
      _
    $region30: #{channel_attention.1} parent=5 // pred_check_branch
      %141 = sbr.rel (%p138) target = $region32
    $region31: #{channel_attention.1} parent=5 // pred_region
      %s142 = ssub.s32 %s9, 1
      %p143 = scmp.lt.s32.totalorder %s14, 1
      %s144 = scalar_select %p143, %s14, 1
      %s145 = smul.addr %s144, 8
      %s146 = smul.addr %s145, 8
      %s147 = scalar_lea.vmem %s0, %s146
      %p148 = pneg %p35
      %p149 = pneg %p32
      %p150 = pneg %p56
      %p151 = pneg %p53
      %p152 = pneg %p77
      %p153 = pneg %p74
      %p154 = pneg %p103
      %p155 = pneg %p100
      %p156 = scmp.lt.s32.totalorder %s14, 1
      %s157 = scalar_select %p156, %s14, 1
      %s158 = smul.addr %s157, 8
      %s159 = smul.addr %s158, 8
      %s160 = scalar_lea.vmem %s3, %s159
      %p161 = scmp.lt.s32.totalorder %s14, 1
      %s162 = scalar_select %p161, %s14, 1
      %s163 = smul.addr %s162, 8
      %s164 = smul.addr %s163, 8
      %s165 = scalar_lea.vmem %s0, %s164
      %p166 = scmp.lt.s32.totalorder %s14, 1
      %s167 = scalar_select %p166, %s14, 1
      %s168 = smul.addr %s167, 8
      %s169 = smul.addr %s168, 8
      %s170 = scalar_lea.vmem %s3, %s169
      %v171 = vld [vmem:[%s165] sm:$0xff]
      %v172 = vld [vmem:[%s165 + $0x8] sm:$0xff]
      %v173 = vld [vmem:[%s165 + $0x10] sm:$0xff]
      %v174 = vld [vmem:[%s165 + $0x18] sm:$0xff]
      %v175 = vld [vmem:[%s165 + $0x20] sm:$0xff]
      %v176 = vld [vmem:[%s165 + $0x28] sm:$0xff]
      %v177 = vld [vmem:[%s165 + $0x30] sm:$0xff]
      %v178 = vld [vmem:[%s165 + $0x38] sm:$0xff]
      %v179 = vmax.f32 %v171, %v172
      %180 = vmax.xlane.f32.xlu0 %v179
      %v181 = vpop.xlane.xlu0 %180
      %v182 = vmax.f32 %v173, %v174
      %183 = vmax.xlane.f32.xlu0 %v182
      %v184 = vpop.xlane.xlu0 %183
      %v185 = vmax.f32 %v175, %v176
      %186 = vmax.xlane.f32.xlu0 %v185
      %v187 = vpop.xlane.xlu0 %186
      %v188 = vmax.f32 %v177, %v178
      %189 = vmax.xlane.f32.xlu0 %v188
      %v190 = vpop.xlane.xlu0 %189
      %v191 = vld [vmem:[%s1] sm:$0x3]
      %v193 = vlaneseq
      %v194 = vshrl.u32 %v193, 7
      %v195 = vsub.s32 0, %v194
      %v196 = vrot.slane %v191, %v195
      %198 = vbcast.lane.b32.xlu0 %v196, 256
      %v199 = vpop.permute.xlu0 %198
      %s201 = sor.u32 256, 8
      %202 = vbcast.lane.b32.xlu0 %v196, %s201
      %v203 = vpop.permute.xlu0 %202
      %s205 = sor.u32 256, 16
      %206 = vbcast.lane.b32.xlu0 %v196, %s205
      %v207 = vpop.permute.xlu0 %206
      %s209 = sor.u32 256, 24
      %210 = vbcast.lane.b32.xlu0 %v196, %s209
      %v211 = vpop.permute.xlu0 %210
      %v212 = vlaneseq
      %v213 = vshrl.u32 %v212, 7
      %v214 = vsub.s32 1, %v213
      %v215 = vrot.slane %v191, %v214
      %217 = vbcast.lane.b32.xlu0 %v215, 256
      %v218 = vpop.permute.xlu0 %217
      %s220 = sor.u32 256, 8
      %221 = vbcast.lane.b32.xlu0 %v215, %s220
      %v222 = vpop.permute.xlu0 %221
      %s224 = sor.u32 256, 16
      %225 = vbcast.lane.b32.xlu0 %v215, %s224
      %v226 = vpop.permute.xlu0 %225
      %s228 = sor.u32 256, 24
      %229 = vbcast.lane.b32.xlu0 %v215, %s228
      %v230 = vpop.permute.xlu0 %229
      %v239 = vmul.f32 %v181, %v199
      %v240 = vmul.f32 %v184, %v203
      %v241 = vmul.f32 %v187, %v207
      %v242 = vmul.f32 %v190, %v211
      %v243 = vmul.f32 %v181, %v218
      %v244 = vmul.f32 %v184, %v222
      %v245 = vmul.f32 %v187, %v226
      %v246 = vmul.f32 %v190, %v230
      %255 = vset.pattern.permute.xlu0 0
      %256 = vperm.xlu0 %255, %v239
      %v257 = vpop.permute.xlu0 %256
      %258 = vset.pattern.permute.xlu0 0
      %259 = vperm.xlu0 %258, %v240
      %v260 = vpop.permute.xlu0 %259
      %261 = vset.pattern.permute.xlu0 0
      %262 = vperm.xlu0 %261, %v241
      %v263 = vpop.permute.xlu0 %262
      %264 = vset.pattern.permute.xlu0 0
      %265 = vperm.xlu0 %264, %v242
      %v266 = vpop.permute.xlu0 %265
      %267 = vset.pattern.permute.xlu0 0
      %268 = vperm.xlu0 %267, %v243
      %v269 = vpop.permute.xlu0 %268
      %270 = vset.pattern.permute.xlu0 0
      %271 = vperm.xlu0 %270, %v244
      %v272 = vpop.permute.xlu0 %271
      %273 = vset.pattern.permute.xlu0 0
      %274 = vperm.xlu0 %273, %v245
      %v275 = vpop.permute.xlu0 %274
      %276 = vset.pattern.permute.xlu0 0
      %277 = vperm.xlu0 %276, %v246
      %v278 = vpop.permute.xlu0 %277
      %v279 = vlaneseq
      %v280 = vand.u32 %v279, 127
      %v281 = vlaneseq
      %v282 = vshrl.u32 %v281, 7
      %v283 = vsub.s32 %v280, %v282
      %v284 = vrot.slane %v257, %v283
      %v285 = vadd.s32 %v280, 4294967288
      %v286 = vlaneseq
      %v287 = vshrl.u32 %v286, 7
      %v288 = vsub.s32 %v285, %v287
      %v289 = vrot.slane %v260, %v288
      %vm290 = vcmask 130112
      %v291 = vsel %vm290, %v289, %v284
      %v292 = vadd.s32 %v280, 4294967280
      %v293 = vlaneseq
      %v294 = vshrl.u32 %v293, 7
      %v295 = vsub.s32 %v292, %v294
      %v296 = vrot.slane %v263, %v295
      %vm297 = vcmask 195712
      %v298 = vsel %vm297, %v296, %v291
      %v299 = vadd.s32 %v280, 4294967272
      %v300 = vlaneseq
      %v301 = vshrl.u32 %v300, 7
      %v302 = vsub.s32 %v299, %v301
      %v303 = vrot.slane %v266, %v302
      %vm304 = vcmask 261312
      %v305 = vsel %vm304, %v303, %v298
      %v306 = vlaneseq
      %v307 = vshrl.u32 %v306, 7
      %v308 = vsub.s32 %v280, %v307
      %v309 = vrot.slane %v269, %v308
      %v310 = vlaneseq
      %v311 = vshrl.u32 %v310, 7
      %v312 = vsub.s32 %v285, %v311
      %v313 = vrot.slane %v272, %v312
      %v314 = vsel %vm290, %v313, %v309
      %v315 = vlaneseq
      %v316 = vshrl.u32 %v315, 7
      %v317 = vsub.s32 %v292, %v316
      %v318 = vrot.slane %v275, %v317
      %v319 = vsel %vm297, %v318, %v314
      %v320 = vlaneseq
      %v321 = vshrl.u32 %v320, 7
      %v322 = vsub.s32 %v299, %v321
      %v323 = vrot.slane %v278, %v322
      %v324 = vsel %vm304, %v323, %v319
      %vm325 = vcmask 1041409
      %v326 = vsel %vm325, %v324, %v305
      %vm328 = vcmask 254976
      %v329 = vsel %vm328, %v326, 0.0
      %330 = vadd.xlane.f32.xlu0 %v329
      %v331 = vpop.xlane.xlu0 %330
      %v332 = vmax.f32 %v331, 0.0
      %v333 = vld [vmem:[%s2] sm:$0x3]
      %v334 = vmul.f32 %v332, %v333
      %v335 = vsel %vm328, %v334, 0.0
      %v336 = vrot.slane %v335, 4
      %v337 = vadd.f32 %v335, %v336
      %v338 = vrot.slane %v337, 2
      %v339 = vadd.f32 %v337, %v338
      %v340 = vrot.slane %v339, 1
      %v341 = vadd.f32 %v339, %v340
      %v342 = vxor.u32 %v341, 2147483648
      %v343 = vmul.f32 %v342, 1.442695
      %v344 = vpow.pop %v343
      %v345 = vadd.f32 %v344, 1.0
      %v346 = vrcp.pop %v345
      %v347 = vmul.f32 1.0, %v346
      %349 = vbcast.lane.b32.xlu0 %v347, 256
      %v350 = vpop.permute.xlu0 %349
      %s352 = sor.u32 256, 8
      %353 = vbcast.lane.b32.xlu0 %v347, %s352
      %v354 = vpop.permute.xlu0 %353
      %s356 = sor.u32 256, 16
      %357 = vbcast.lane.b32.xlu0 %v347, %s356
      %v358 = vpop.permute.xlu0 %357
      %s360 = sor.u32 256, 24
      %361 = vbcast.lane.b32.xlu0 %v347, %s360
      %v362 = vpop.permute.xlu0 %361
      %v363 = vmul.f32 %v171, %v350
      %v364 = vmul.f32 %v172, %v350
      %v365 = vmul.f32 %v173, %v354
      %v366 = vmul.f32 %v174, %v354
      %v367 = vmul.f32 %v175, %v358
      %v368 = vmul.f32 %v176, %v358
      %v369 = vmul.f32 %v177, %v362
      %v370 = vmul.f32 %v178, %v362
      %371 = vst [vmem:[%s170] sm:$0xff] %v363
      %372 = vst [vmem:[%s170 + $0x8] sm:$0xff] %v364
      %373 = vst [vmem:[%s170 + $0x10] sm:$0xff] %v365
      %374 = vst [vmem:[%s170 + $0x18] sm:$0xff] %v366
      %375 = vst [vmem:[%s170 + $0x20] sm:$0xff] %v367
      %376 = vst [vmem:[%s170 + $0x28] sm:$0xff] %v368
      %377 = vst [vmem:[%s170 + $0x30] sm:$0xff] %v369
      %378 = vst [vmem:[%s170 + $0x38] sm:$0xff] %v370
      %p379 = scmp.lt.s32.totalorder %s14, 1
      %s380 = scalar_select %p379, %s14, 1
      %s381 = smul.addr %s380, 8
      %s382 = smul.addr %s381, 8
      %s383 = scalar_lea.vmem %s3, %s382
      // Predicated region
      $region33: #{channel_attention.1} parent=31 // pred_check
        %p384 = pneg %p100
      $region34: #{channel_attention.1} parent=31 // pred_check_branch
        %386 = sbr.rel (%p384) target = $region36
      $region35: #{channel_attention.1} parent=31 // pred_region
        _
      $region36: #{channel_attention.1} parent=31 // pred_fallthru
        _
    $region32: #{channel_attention.1} parent=5 // pred_fallthru
      _
    %p387 = scmp.le.s32.totalorder 2, %s9
    // Predicated region
    $region37: #{channel_attention.1} parent=5 // pred_check
      %p388 = pneg %p387
    $region38: #{channel_attention.1} parent=5 // pred_check_branch
      %390 = sbr.rel (%p388) target = $region40
    $region39: #{channel_attention.1} parent=5 // pred_region
      %s391 = ssub.s32 %s9, 2
      // Predicated region
      $region41: #{channel_attention.1} parent=39 // pred_check
        %p392 = pneg %p106
      $region42: #{channel_attention.1} parent=39 // pred_check_branch
        %394 = sbr.rel (%p392) target = $region44
      $region43: #{channel_attention.1} parent=39 // pred_region
        %p395 = scmp.lt.s32.totalorder %s15, 1
        %s396 = scalar_select %p395, %s15, 1
        %s397 = smul.addr %s396, 8
        %s398 = smul.addr %s397, 8
        %s399 = scalar_lea.vmem %s3, %s398
      $region44: #{channel_attention.1} parent=39 // pred_fallthru
        _
    $region40: #{channel_attention.1} parent=5 // pred_fallthru
      _
  $region6: #{channel_attention.1} parent=0 // loop_footer
    %s13 = sadd.s32 1, %s9
  $region7: #{channel_attention.1} parent=0 // loop_footer_branch
    %8 = sbr.rel target = $region3
  $region8: #{channel_attention.1} parent=0 // loop_exit
    _

</llo_original>
